<compile_context>
chip_gen: v7x
topology: tpu7x:2x2x1
jax: 0.10.0
libtpu: 0.0.40
codegen_flags: <defaults>
</compile_context>

<pallas_src>
import jax
import jax.numpy as jnp
import numpy as np
from jax import lax
from jax.experimental import pallas as pl
from jax.experimental.pallas import tpu as pltpu

BN_EPS = 1e-5


# ----------------------------------------------------------------------------
# BatchNorm folding (eval mode) -> per-channel (scale, bias)
# ----------------------------------------------------------------------------
def _fold_bn(conv_bias, gamma, beta, mean, var):
    if gamma is None:
        return jnp.ones_like(conv_bias), conv_bias
    scale = gamma / jnp.sqrt(var + BN_EPS)
    bias = beta + scale * (conv_bias - mean)
    return scale, bias


# ----------------------------------------------------------------------------
# Host-side: fold a (transposed) conv layer into one dense matrix
#   M[ci*Hi*Wi + m_in, co*Ho*Wo + m_out]
# ----------------------------------------------------------------------------
def _layer_matrix(w_fwd_scaled, cfg):
    """w_fwd_scaled: [cout, cin, k, k] (BN scale folded, taps already flipped for
    transposed conv). Returns np.float32 [cin*mi, cout*mo]."""
    cout, cin, k, _ = w_fwd_scaled.shape
    hi, wi, ho, wo = cfg["hi"], cfg["wi"], cfg["ho"], cfg["wo"]
    mi, mo = hi * wi, ho * wo

    ih = (np.arange(mi) // wi)[:, None]
    iw = (np.arange(mi) % wi)[:, None]
    oh = (np.arange(mo) // wo)[None, :]
    ow = (np.arange(mo) % wo)[None, :]

    G = np.zeros((k, k, mi, mo), np.float32)
    for kh in range(k):
        for kw in range(k):
            if cfg["transposed"]:
                # stride-1 conv on 2x zero-dilated, plo-padded input (flipped taps)
                hit = ((2 * ih == oh + kh - cfg["plo"]) &
                       (2 * iw == ow + kw - cfg["plo"]))
            else:
                # stride-2 conv with symmetric padding `pad`
                hit = ((ih == 2 * oh + kh - cfg["pad"]) &
                       (iw == 2 * ow + kw - cfg["pad"]))
            G[kh, kw] = hit  # out-of-range targets have all-zero columns == zero pad

    # M4[c, i, o, j] = sum_{kh,kw} w[o, c, kh, kw] * G[kh, kw, i, j]
    M4 = np.einsum("ocab,abij->cioj", w_fwd_scaled, G)
    return np.ascontiguousarray(M4.reshape(cin * mi, cout * mo).astype(np.float32))


def prepare_bp_params(params, H, W):
    """Fold every layer into (dense matrix, bias vector); pack for the kernel."""
    layer_mats, layer_biases = [], []
    h, w = H, W
    cin0 = params["encoder"][0]["w"].shape[1]
    c_last = cin0

    for p in params["encoder"]:
        cout, cin, k, _ = p["w"].shape
        assert k % 2 == 1 and p["pad"] == k // 2 and h % 2 == 0 and w % 2 == 0
        cfg = dict(transposed=False, pad=p["pad"], hi=h, wi=w, ho=h // 2, wo=w // 2)
        scale, bias = _fold_bn(p["b"], p.get("gamma"), p.get("beta"),
                               p.get("mean"), p.get("var"))
        w_scaled = p["w"] * scale[:, None, None, None]          # [cout, cin, k, k]
        layer_mats.append(_layer_matrix(np.asarray(w_scaled, np.float32), cfg))
        layer_biases.append(np.repeat(np.asarray(bias, np.float32),
                                      cfg["ho"] * cfg["wo"]))
        h, w, c_last = cfg["ho"], cfg["wo"], cout

    for p in params["decoder"]:
        cin, cout, k, _ = p["w"].shape
        assert k % 2 == 1 and p["pad"] == k // 2 and p.get("out_pad", 1) == 1
        cfg = dict(transposed=True, plo=k - 1 - p["pad"], hi=h, wi=w, ho=2 * h, wo=2 * w)
        # equivalent forward conv: flip spatial taps, swap in/out channels
        w_fwd = jnp.transpose(p["w"][:, :, ::-1, ::-1], (1, 0, 2, 3))  # [cout,cin,k,k]
        scale, bias = _fold_bn(p["b"], p.get("gamma"), p.get("beta"),
                               p.get("mean"), p.get("var"))
        w_scaled = w_fwd * scale[:, None, None, None]
        layer_mats.append(_layer_matrix(np.asarray(w_scaled, np.float32), cfg))
        layer_biases.append(np.repeat(np.asarray(bias, np.float32),
                                      cfg["ho"] * cfg["wo"]))
        h, w, c_last = cfg["ho"], cfg["wo"], cout

    widths = tuple(m.shape[1] for m in layer_mats)
    L = len(layer_mats)
    bias_packed = np.zeros((L, max(widths)), np.float32)
    for li, bv in enumerate(layer_biases):
        bias_packed[li, : bv.shape[0]] = bv

    total_bytes = sum(m.nbytes for m in layer_mats)
    assert total_bytes < 24 * 1024 * 1024, "folded layer matrices too large for VMEM"
    # TODO(synk): for large spatial sizes the dense folded matrices scale
    # O((H*W)^2) per layer; switch to pltpu.roll-based shifted taps there.

    return dict(
        Ms=[jnp.asarray(m) for m in layer_mats],
        bias_packed=jnp.asarray(bias_packed),
        widths=widths,
        in_dim=cin0 * H * W,
        out_chw=(c_last, h, w),
    )


# ----------------------------------------------------------------------------
# Fused kernel: 6 lane-dense matmuls (one per layer) + bias + ReLU, all in VMEM
# ----------------------------------------------------------------------------
def _make_bp_kernel(num_layers, widths):
    def kernel(x_ref, *refs):
        m_refs = refs[:num_layers]
        b_ref = refs[num_layers]
        out_ref = refs[num_layers + 1]
        a = x_ref[...].astype(jnp.float32)                       # [B, Cin*H*W]
        for li in range(num_layers):
            a = jnp.dot(a, m_refs[li][...],
                        preferred_element_type=jnp.float32)      # [B, Cout*Ho*Wo]
            a = a + b_ref[li:li + 1, 0:widths[li]]                # bias (bcast over B)
            a = jnp.maximum(a, 0.0)                               # ReLU
        out_ref[...] = a.astype(out_ref.dtype)
    return kernel


def _pick_batch_block(n):
    if n <= 8:
        return n
    for b in (64, 32, 16, 8):
        if n % b == 0:
            return b
    return n


def bp_forward(x_nchw, packed, batch_block=None):
    Ms = packed["Ms"]
    bias_packed = packed["bias_packed"]
    widths = packed["widths"]
    c_last, h_last, w_last = packed["out_chw"]

    N, C, H, W = x_nchw.shape
    d_in = C * H * W
    assert d_in == packed["in_dim"], (d_in, packed["in_dim"])
    d_out = c_last * h_last * w_last

    B = batch_block or _pick_batch_block(N)
    assert N % B == 0 and (B == N or B % 8 == 0), (N, B)

    x2 = x_nchw.reshape(N, d_in).astype(jnp.float32)
    L = len(Ms)

    # constant index maps -> weights / biases are DMA'd once and stay resident
    m_specs = [pl.BlockSpec(m.shape, lambda n: (0, 0)) for m in Ms]
    b_spec = pl.BlockSpec(bias_packed.shape, lambda n: (0, 0))

    out = pl.pallas_call(
        _make_bp_kernel(L, widths),
        out_shape=jax.ShapeDtypeStruct((N, d_out), jnp.float32),
        grid=(N // B,),
        in_specs=[pl.BlockSpec((B, d_in), lambda n: (n, 0))] + m_specs + [b_spec],
        out_specs=pl.BlockSpec((B, d_out), lambda n: (n, 0)),
        compiler_params=pltpu.CompilerParams(
            dimension_semantics=("parallel",)),
    )(x2, *Ms, bias_packed)

    return out.reshape(N, c_last, h_last, w_last)                 # NCHW


# ----------------------------------------------------------------------------
# BPModel parameters (raw, torch-layout)
# ----------------------------------------------------------------------------
def init_bp_params(filters, kernels, key):
    filt = [1] + list(filters)
    keys = iter(jax.random.split(key, 64))

    def bn_params(c):
        return dict(
            gamma=0.5 + 0.5 * jax.random.uniform(next(keys), (c,), jnp.float32),
            beta=0.1 * jax.random.normal(next(keys), (c,), jnp.float32),
            mean=0.05 * jax.random.normal(next(keys), (c,), jnp.float32),
            var=0.5 + jax.random.uniform(next(keys), (c,), jnp.float32),
        )

    encoder = []
    for i in range(len(kernels)):
        cin, cout, k = filt[i], filt[i + 1], kernels[i]
        p = dict(
            w=0.2 * jax.random.normal(next(keys), (cout, cin, k, k), jnp.float32),
            b=0.05 * jax.random.normal(next(keys), (cout,), jnp.float32),
            pad=k // 2,
        )
        p.update(bn_params(cout))                 # 'batch' norm + relu
        encoder.append(p)

    decoder = []
    for i in range(len(kernels) - 1, 1, -1):      # batch norm + relu
        cin, cout, k = filt[i + 1], filt[i], kernels[i]
        p = dict(
            w=0.2 * jax.random.normal(next(keys), (cin, cout, k, k), jnp.float32),
            b=0.05 * jax.random.normal(next(keys), (cout,), jnp.float32),
            pad=k // 2, out_pad=1,
        )
        p.update(bn_params(cout))
        decoder.append(p)
    for (cin, cout, k) in [(filt[2], filt[1], kernels[1]), (filt[1], filt[0], kernels[0])]:
        decoder.append(dict(                      # 'identity' norm + relu
            w=0.2 * jax.random.normal(next(keys), (cin, cout, k, k), jnp.float32),
            b=0.05 * jax.random.normal(next(keys), (cout,), jnp.float32),
            pad=k // 2, out_pad=1,
            gamma=None, beta=None, mean=None, var=None,
        ))
    return dict(encoder=encoder, decoder=decoder)


# ----------------------------------------------------------------------------
# Pure-JAX (XLA conv) reference for validation
# ----------------------------------------------------------------------------
def _ref_forward(x_nchw, params):
    x = jnp.transpose(x_nchw, (0, 2, 3, 1)).astype(jnp.float32)
    dn = ("NHWC", "HWIO", "NHWC")
    for p in params["encoder"]:
        w = jnp.transpose(p["w"], (2, 3, 1, 0))
        y = lax.conv_general_dilated(x, w, (2, 2), [(p["pad"], p["pad"])] * 2,
                                     dimension_numbers=dn)
        scale, bias = _fold_bn(p["b"], p["gamma"], p["beta"], p["mean"], p["var"])
        x = jnp.maximum(y * scale + bias, 0.0)
    for p in params["decoder"]:
        k = p["w"].shape[2]
        w = jnp.transpose(p["w"][:, :, ::-1, ::-1], (2, 3, 0, 1))
        lo, hi = k - 1 - p["pad"], k - 1 - p["pad"] + p["out_pad"]
        y = lax.conv_general_dilated(x, w, (1, 1), [(lo, hi)] * 2,
                                     lhs_dilation=(2, 2), dimension_numbers=dn)
        scale, bias = _fold_bn(p["b"], p.get("gamma"), p.get("beta"),
                               p.get("mean"), p.get("var"))
        x = jnp.maximum(y * scale + bias, 0.0)
    return jnp.transpose(x, (0, 3, 1, 2))


# ----------------------------------------------------------------------------
if __name__ == "__main__":
    # BPModel(filters=[4, 8, 16], kernels=[3, 3, 3]); input is single-channel NCHW.
    filters = [4, 8, 16]
    kernels = [3, 3, 3]
    raw_params = init_bp_params(filters, kernels, jax.random.PRNGKey(42))
    packed = prepare_bp_params(raw_params, H=16, W=16)

    x = jax.random.normal(jax.random.PRNGKey(0), (2, 1, 16, 16), jnp.float32)

    fwd = jax.jit(lambda xx: bp_forward(xx, packed))
    out = jax.block_until_ready(fwd(x))
    assert out.shape == (2, 1, 16, 16), out.shape

    ref = jax.block_until_ready(_ref_forward(x, raw_params))
    np.testing.assert_allclose(np.asarray(out), np.asarray(ref), rtol=2e-3, atol=2e-3)

    # TODO(synk): BatchNorm is evaluated in inference mode (folded running stats);
    # PyTorch training-mode batch statistics are not reproduced.
    print("KERNEL_OK")
</pallas_src>

<mosaic_0001>
module attributes {stable_mosaic.version = 11 : i64} {
  func.func @kernel(%arg0: i32, %arg1: memref<2x256xf32, #tpu.memory_space<vmem>>, %arg2: memref<256x256xf32, #tpu.memory_space<vmem>>, %arg3: memref<256x128xf32, #tpu.memory_space<vmem>>, %arg4: memref<128x64xf32, #tpu.memory_space<vmem>>, %arg5: memref<64x128xf32, #tpu.memory_space<vmem>>, %arg6: memref<128x256xf32, #tpu.memory_space<vmem>>, %arg7: memref<256x256xf32, #tpu.memory_space<vmem>>, %arg8: memref<6x256xf32, #tpu.memory_space<vmem>>, %arg9: memref<2x256xf32, #tpu.memory_space<vmem>>) attributes {dimension_semantics = [#tpu.dimension_semantics<parallel>], iteration_bounds = array<i64: 1>, scalar_prefetch = 0 : i64, scratch_operands = 0 : i64, tpu.core_type = #tpu.core_type<tc>, window_params = [{transform_indices = @transform_0, window_bounds = array<i64: 2, 256>}, {pipeline_mode = #tpu.pipeline_mode<synchronous>, transform_indices = @transform_1, window_bounds = array<i64: 256, 256>}, {pipeline_mode = #tpu.pipeline_mode<synchronous>, transform_indices = @transform_2, window_bounds = array<i64: 256, 128>}, {pipeline_mode = #tpu.pipeline_mode<synchronous>, transform_indices = @transform_3, window_bounds = array<i64: 128, 64>}, {pipeline_mode = #tpu.pipeline_mode<synchronous>, transform_indices = @transform_4, window_bounds = array<i64: 64, 128>}, {pipeline_mode = #tpu.pipeline_mode<synchronous>, transform_indices = @transform_5, window_bounds = array<i64: 128, 256>}, {pipeline_mode = #tpu.pipeline_mode<synchronous>, transform_indices = @transform_6, window_bounds = array<i64: 256, 256>}, {pipeline_mode = #tpu.pipeline_mode<synchronous>, transform_indices = @transform_7, window_bounds = array<i64: 6, 256>}, {transform_indices = @transform_8, window_bounds = array<i64: 2, 256>}]} {
    %c0 = arith.constant 0 : index
    %c0_0 = arith.constant 0 : index
    %0 = vector.load %arg1[%c0, %c0_0] : memref<2x256xf32, #tpu.memory_space<vmem>>, vector<2x256xf32>
    %c0_1 = arith.constant 0 : index
    %c0_2 = arith.constant 0 : index
    %1 = vector.load %arg2[%c0_1, %c0_2] : memref<256x256xf32, #tpu.memory_space<vmem>>, vector<256x256xf32>
    %cst = arith.constant dense<0.000000e+00> : vector<2x256xf32>
    %2 = tpu.matmul %0, %1, %cst {dimension_numbers = #tpu.dot_dimension_numbers<[1], [0], [0], [1], [0, 0, 1, 1], [], []>} : vector<2x256xf32>, vector<256x256xf32>, vector<2x256xf32> -> vector<2x256xf32>
    %c0_3 = arith.constant 0 : index
    %c0_4 = arith.constant 0 : index
    %3 = vector.load %arg8[%c0_3, %c0_4] : memref<6x256xf32, #tpu.memory_space<vmem>>, vector<1x256xf32>
    %4 = vector.broadcast %3 : vector<1x256xf32> to vector<2x256xf32>
    %5 = arith.addf %2, %4 : vector<2x256xf32>
    %cst_5 = arith.constant 0.000000e+00 : f32
    %6 = vector.broadcast %cst_5 : f32 to vector<2x256xf32>
    %7 = arith.maximumf %5, %6 : vector<2x256xf32>
    %c0_6 = arith.constant 0 : index
    %c0_7 = arith.constant 0 : index
    %8 = vector.load %arg3[%c0_6, %c0_7] : memref<256x128xf32, #tpu.memory_space<vmem>>, vector<256x128xf32>
    %cst_8 = arith.constant dense<0.000000e+00> : vector<2x128xf32>
    %9 = tpu.matmul %7, %8, %cst_8 {dimension_numbers = #tpu.dot_dimension_numbers<[1], [0], [0], [1], [0, 0, 1, 1], [], []>} : vector<2x256xf32>, vector<256x128xf32>, vector<2x128xf32> -> vector<2x128xf32>
    %c1 = arith.constant 1 : index
    %c0_9 = arith.constant 0 : index
    %10 = vector.load %arg8[%c1, %c0_9] : memref<6x256xf32, #tpu.memory_space<vmem>>, vector<1x128xf32>
    %11 = vector.broadcast %10 : vector<1x128xf32> to vector<2x128xf32>
    %12 = arith.addf %9, %11 : vector<2x128xf32>
    %cst_10 = arith.constant 0.000000e+00 : f32
    %13 = vector.broadcast %cst_10 : f32 to vector<2x128xf32>
    %14 = arith.maximumf %12, %13 : vector<2x128xf32>
    %c0_11 = arith.constant 0 : index
    %c0_12 = arith.constant 0 : index
    %15 = vector.load %arg4[%c0_11, %c0_12] : memref<128x64xf32, #tpu.memory_space<vmem>>, vector<128x64xf32>
    %cst_13 = arith.constant dense<0.000000e+00> : vector<2x64xf32>
    %16 = tpu.matmul %14, %15, %cst_13 {dimension_numbers = #tpu.dot_dimension_numbers<[1], [0], [0], [1], [0, 0, 1, 1], [], []>} : vector<2x128xf32>, vector<128x64xf32>, vector<2x64xf32> -> vector<2x64xf32>
    %c2 = arith.constant 2 : index
    %c0_14 = arith.constant 0 : index
    %17 = vector.load %arg8[%c2, %c0_14] : memref<6x256xf32, #tpu.memory_space<vmem>>, vector<1x64xf32>
    %18 = vector.broadcast %17 : vector<1x64xf32> to vector<2x64xf32>
    %19 = arith.addf %16, %18 : vector<2x64xf32>
    %cst_15 = arith.constant 0.000000e+00 : f32
    %20 = vector.broadcast %cst_15 : f32 to vector<2x64xf32>
    %21 = arith.maximumf %19, %20 : vector<2x64xf32>
    %c0_16 = arith.constant 0 : index
    %c0_17 = arith.constant 0 : index
    %22 = vector.load %arg5[%c0_16, %c0_17] : memref<64x128xf32, #tpu.memory_space<vmem>>, vector<64x128xf32>
    %cst_18 = arith.constant dense<0.000000e+00> : vector<2x128xf32>
    %23 = tpu.matmul %21, %22, %cst_18 {dimension_numbers = #tpu.dot_dimension_numbers<[1], [0], [0], [1], [0, 0, 1, 1], [], []>} : vector<2x64xf32>, vector<64x128xf32>, vector<2x128xf32> -> vector<2x128xf32>
    %c3 = arith.constant 3 : index
    %c0_19 = arith.constant 0 : index
    %24 = vector.load %arg8[%c3, %c0_19] : memref<6x256xf32, #tpu.memory_space<vmem>>, vector<1x128xf32>
    %25 = vector.broadcast %24 : vector<1x128xf32> to vector<2x128xf32>
    %26 = arith.addf %23, %25 : vector<2x128xf32>
    %cst_20 = arith.constant 0.000000e+00 : f32
    %27 = vector.broadcast %cst_20 : f32 to vector<2x128xf32>
    %28 = arith.maximumf %26, %27 : vector<2x128xf32>
    %c0_21 = arith.constant 0 : index
    %c0_22 = arith.constant 0 : index
    %29 = vector.load %arg6[%c0_21, %c0_22] : memref<128x256xf32, #tpu.memory_space<vmem>>, vector<128x256xf32>
    %cst_23 = arith.constant dense<0.000000e+00> : vector<2x256xf32>
    %30 = tpu.matmul %28, %29, %cst_23 {dimension_numbers = #tpu.dot_dimension_numbers<[1], [0], [0], [1], [0, 0, 1, 1], [], []>} : vector<2x128xf32>, vector<128x256xf32>, vector<2x256xf32> -> vector<2x256xf32>
    %c4 = arith.constant 4 : index
    %c0_24 = arith.constant 0 : index
    %31 = vector.load %arg8[%c4, %c0_24] : memref<6x256xf32, #tpu.memory_space<vmem>>, vector<1x256xf32>
    %32 = vector.broadcast %31 : vector<1x256xf32> to vector<2x256xf32>
    %33 = arith.addf %30, %32 : vector<2x256xf32>
    %cst_25 = arith.constant 0.000000e+00 : f32
    %34 = vector.broadcast %cst_25 : f32 to vector<2x256xf32>
    %35 = arith.maximumf %33, %34 : vector<2x256xf32>
    %c0_26 = arith.constant 0 : index
    %c0_27 = arith.constant 0 : index
    %36 = vector.load %arg7[%c0_26, %c0_27] : memref<256x256xf32, #tpu.memory_space<vmem>>, vector<256x256xf32>
    %cst_28 = arith.constant dense<0.000000e+00> : vector<2x256xf32>
    %37 = tpu.matmul %35, %36, %cst_28 {dimension_numbers = #tpu.dot_dimension_numbers<[1], [0], [0], [1], [0, 0, 1, 1], [], []>} : vector<2x256xf32>, vector<256x256xf32>, vector<2x256xf32> -> vector<2x256xf32>
    %c5 = arith.constant 5 : index
    %c0_29 = arith.constant 0 : index
    %38 = vector.load %arg8[%c5, %c0_29] : memref<6x256xf32, #tpu.memory_space<vmem>>, vector<1x256xf32>
    %39 = vector.broadcast %38 : vector<1x256xf32> to vector<2x256xf32>
    %40 = arith.addf %37, %39 : vector<2x256xf32>
    %cst_30 = arith.constant 0.000000e+00 : f32
    %41 = vector.broadcast %cst_30 : f32 to vector<2x256xf32>
    %42 = arith.maximumf %40, %41 : vector<2x256xf32>
    %c0_31 = arith.constant 0 : index
    %c0_32 = arith.constant 0 : index
    %43 = vector.load %arg9[%c0_31, %c0_32] : memref<2x256xf32, #tpu.memory_space<vmem>>, vector<2x256xf32>
    tpu.vector_store %arg9[%c0_31, %c0_32], %42 {strides = array<i32>} : memref<2x256xf32, #tpu.memory_space<vmem>>, vector<2x256xf32>,
    return
  }
  func.func @transform_0(%arg0: i32) -> (i32, i32) {
    %c0_i32 = arith.constant 0 : i32
    %c0_i32_0 = arith.constant 0 : i32
    return %arg0, %c0_i32 : i32, i32
  }
  func.func @transform_1(%arg0: i32) -> (i32, i32) {
    %c0_i32 = arith.constant 0 : i32
    %c0_i32_0 = arith.constant 0 : i32
    %c0_i32_1 = arith.constant 0 : i32
    return %c0_i32, %c0_i32_0 : i32, i32
  }
  func.func @transform_2(%arg0: i32) -> (i32, i32) {
    %c0_i32 = arith.constant 0 : i32
    %c0_i32_0 = arith.constant 0 : i32
    %c0_i32_1 = arith.constant 0 : i32
    return %c0_i32, %c0_i32_0 : i32, i32
  }
  func.func @transform_3(%arg0: i32) -> (i32, i32) {
    %c0_i32 = arith.constant 0 : i32
    %c0_i32_0 = arith.constant 0 : i32
    %c0_i32_1 = arith.constant 0 : i32
    return %c0_i32, %c0_i32_0 : i32, i32
  }
  func.func @transform_4(%arg0: i32) -> (i32, i32) {
    %c0_i32 = arith.constant 0 : i32
    %c0_i32_0 = arith.constant 0 : i32
    %c0_i32_1 = arith.constant 0 : i32
    return %c0_i32, %c0_i32_0 : i32, i32
  }
  func.func @transform_5(%arg0: i32) -> (i32, i32) {
    %c0_i32 = arith.constant 0 : i32
    %c0_i32_0 = arith.constant 0 : i32
    %c0_i32_1 = arith.constant 0 : i32
    return %c0_i32, %c0_i32_0 : i32, i32
  }
  func.func @transform_6(%arg0: i32) -> (i32, i32) {
    %c0_i32 = arith.constant 0 : i32
    %c0_i32_0 = arith.constant 0 : i32
    %c0_i32_1 = arith.constant 0 : i32
    return %c0_i32, %c0_i32_0 : i32, i32
  }
  func.func @transform_7(%arg0: i32) -> (i32, i32) {
    %c0_i32 = arith.constant 0 : i32
    %c0_i32_0 = arith.constant 0 : i32
    %c0_i32_1 = arith.constant 0 : i32
    return %c0_i32, %c0_i32_0 : i32, i32
  }
  func.func @transform_8(%arg0: i32) -> (i32, i32) {
    %c0_i32 = arith.constant 0 : i32
    %c0_i32_0 = arith.constant 0 : i32
    return %arg0, %c0_i32 : i32, i32
  }
}

</mosaic_0001>

<llo_original>
// kernel: _lambda_.1
$region0: #{_lambda_.1}
  #allocation0 [shape = 'u32[]', space=smem, size = 0x4, offset = 0x4, fixed_abs, tag = 'smem constant byte address 0x4 - core index']
  #allocation1 [shape = 'u32[144,128]{1,0:T(1,128)}', space=vmem, size = 0x12000, scoped, tag = 'internal scratch']
  %s0 = inlined_call_operand.vmem [shape: f32[2,256], index: 0, kind: input, shape index: {}]
  %s1 = inlined_call_operand.hbm [shape: f32[256,256], index: 1, kind: input, shape index: {}]
  %s2 = inlined_call_operand.hbm [shape: f32[256,128], index: 2, kind: input, shape index: {}]
  %s3 = inlined_call_operand.hbm [shape: f32[128,64], index: 3, kind: input, shape index: {}]
  %s4 = inlined_call_operand.hbm [shape: f32[64,128], index: 4, kind: input, shape index: {}]
  %s5 = inlined_call_operand.hbm [shape: f32[128,256], index: 5, kind: input, shape index: {}]
  %s6 = inlined_call_operand.hbm [shape: f32[256,256], index: 6, kind: input, shape index: {}]
  %s7 = inlined_call_operand.vmem [shape: f32[6,256], index: 7, kind: input, shape index: {}]
  %s8 = inlined_call_operand.vmem [shape: f32[2,256], index: 8, kind: output, shape index: {}]
  %s9 = sld [smem:[#allocation0]]
  $region66: #{_lambda_.1} parent=0
    _
  %s11 = ssub.s32 1, %s9
  %s12 = scalar_select 0, %s11, %s9
  $region1: #{_lambda_.1} parent=0
    #allocation2 [shape = 'u8[262144]{0}', space=vmem, size = 0x40000, scoped, tag = 'input window, operand 1, single buffered']
    #allocation3 [shape = 's32[1]{0}', space=sflag, size = 0x4, scoped, tag = 'scoped memory for _lambda_.1']
    #allocation4 [shape = 'u8[131072]{0}', space=vmem, size = 0x20000, scoped, tag = 'input window, operand 2, single buffered']
    #allocation5 [shape = 's32[1]{0}', space=sflag, size = 0x4, scoped, tag = 'scoped memory for _lambda_.1']
    #allocation6 [shape = 'u8[65536]{0}', space=vmem, size = 0x10000, scoped, tag = 'input window, operand 3, single buffered']
    #allocation7 [shape = 'u8[32768]{0}', space=vmem, size = 0x8000, scoped, tag = 'input window, operand 4, single buffered']
    #allocation8 [shape = 's32[1]{0}', space=sflag, size = 0x4, scoped, tag = 'scoped memory for _lambda_.1']
    #allocation9 [shape = 'u8[131072]{0}', space=vmem, size = 0x20000, scoped, tag = 'input window, operand 5, single buffered']
    #allocation10 [shape = 'u8[262144]{0}', space=vmem, size = 0x40000, scoped, tag = 'input window, operand 6, single buffered']
    #allocation11 [shape = 's32[1]{0}', space=sflag, size = 0x4, scoped, tag = 'scoped memory for _lambda_.1']
    %13 = vsyncpa [#allocation3], 0
    %14 = vsyncpa [#allocation5], 0
    %15 = vsyncpa [#allocation8], 0
    %16 = vsyncpa [#allocation11], 0
    // Predicated region
    $region2: #{_lambda_.1} parent=1 // pred_check
      _
    $region3: #{_lambda_.1} parent=1 // pred_check_branch
      %18 = sbr.rel (0) target = $region5
    $region4: #{_lambda_.1} parent=1 // pred_region
      _
    $region5: #{_lambda_.1} parent=1 // pred_fallthru
      _
    // Predicated region
    $region6: #{_lambda_.1} parent=1 // pred_check
      _
    $region7: #{_lambda_.1} parent=1 // pred_check_branch
      %20 = sbr.rel (0) target = $region9
    $region8: #{_lambda_.1} parent=1 // pred_region
      %s22 = ssub.s32 8192, 8192
      %23 = vsyncadd [#allocation3], %s22
      %s24 = sshll.u32 [#allocation2], 4
      %s25 = int_to_ptr.vmem [resolvable:$true] %s24
      %30 = dma.hbm_to_vmem [thread:$0]  %s1, 8192, %s25, [#allocation3], 256, 256, 16
    $region9: #{_lambda_.1} parent=1 // pred_fallthru
      _
    // Predicated region
    $region10: #{_lambda_.1} parent=1 // pred_check
      _
    $region11: #{_lambda_.1} parent=1 // pred_check_branch
      %32 = sbr.rel (0) target = $region13
    $region12: #{_lambda_.1} parent=1 // pred_region
      %s34 = ssub.s32 4096, 4096
      %35 = vsyncadd [#allocation5], %s34
      %s36 = sshll.u32 [#allocation4], 4
      %s37 = int_to_ptr.vmem [resolvable:$true] %s36
      %42 = dma.hbm_to_vmem [thread:$0]  %s2, 4096, %s37, [#allocation5], 128, 128, 8
    $region13: #{_lambda_.1} parent=1 // pred_fallthru
      _
    // Predicated region
    $region14: #{_lambda_.1} parent=1 // pred_check
      _
    $region15: #{_lambda_.1} parent=1 // pred_check_branch
      %44 = sbr.rel (0) target = $region17
    $region16: #{_lambda_.1} parent=1 // pred_region
      %s46 = ssub.s32 2048, 2048
      %47 = vsyncadd [#allocation5], %s46
      %s48 = sshll.u32 [#allocation6], 4
      %s49 = int_to_ptr.vmem [resolvable:$true] %s48
      %54 = dma.hbm_to_vmem [thread:$0]  %s3, 2048, %s49, [#allocation5], 128, 128, 8
    $region17: #{_lambda_.1} parent=1 // pred_fallthru
      _
    // Predicated region
    $region18: #{_lambda_.1} parent=1 // pred_check
      _
    $region19: #{_lambda_.1} parent=1 // pred_check_branch
      %56 = sbr.rel (0) target = $region21
    $region20: #{_lambda_.1} parent=1 // pred_region
      %s58 = ssub.s32 1024, 1024
      %59 = vsyncadd [#allocation8], %s58
      %s60 = sshll.u32 [#allocation7], 4
      %s61 = int_to_ptr.vmem [resolvable:$true] %s60
      %66 = dma.hbm_to_vmem [thread:$0]  %s4, 1024, %s61, [#allocation8], 128, 128, 8
    $region21: #{_lambda_.1} parent=1 // pred_fallthru
      _
    // Predicated region
    $region22: #{_lambda_.1} parent=1 // pred_check
      _
    $region23: #{_lambda_.1} parent=1 // pred_check_branch
      %68 = sbr.rel (0) target = $region25
    $region24: #{_lambda_.1} parent=1 // pred_region
      %s70 = ssub.s32 4096, 4096
      %71 = vsyncadd [#allocation8], %s70
      %s72 = sshll.u32 [#allocation9], 4
      %s73 = int_to_ptr.vmem [resolvable:$true] %s72
      %78 = dma.hbm_to_vmem [thread:$0]  %s5, 4096, %s73, [#allocation8], 256, 256, 16
    $region25: #{_lambda_.1} parent=1 // pred_fallthru
      _
    // Predicated region
    $region26: #{_lambda_.1} parent=1 // pred_check
      _
    $region27: #{_lambda_.1} parent=1 // pred_check_branch
      %80 = sbr.rel (0) target = $region29
    $region28: #{_lambda_.1} parent=1 // pred_region
      %s82 = ssub.s32 8192, 8192
      %83 = vsyncadd [#allocation11], %s82
      %s84 = sshll.u32 [#allocation10], 4
      %s85 = int_to_ptr.vmem [resolvable:$true] %s84
      %90 = dma.hbm_to_vmem [thread:$0]  %s6, 8192, %s85, [#allocation11], 256, 256, 16
    $region29: #{_lambda_.1} parent=1 // pred_fallthru
      _
    // Predicated region
    $region30: #{_lambda_.1} parent=1 // pred_check
      _
    $region31: #{_lambda_.1} parent=1 // pred_check_branch
      %92 = sbr.rel (0) target = $region33
    $region32: #{_lambda_.1} parent=1 // pred_region
      _
    $region33: #{_lambda_.1} parent=1 // pred_fallthru
      _
    // Predicated region
    $region34: #{_lambda_.1} parent=1 // pred_check
      _
    $region35: #{_lambda_.1} parent=1 // pred_check_branch
      %94 = sbr.rel (0) target = $region37
    $region36: #{_lambda_.1} parent=1 // pred_region
      %95 = dma.done [#allocation3], 8192
    $region37: #{_lambda_.1} parent=1 // pred_fallthru
      _
    // Predicated region
    $region38: #{_lambda_.1} parent=1 // pred_check
      _
    $region39: #{_lambda_.1} parent=1 // pred_check_branch
      %97 = sbr.rel (0) target = $region41
    $region40: #{_lambda_.1} parent=1 // pred_region
      %98 = dma.done [#allocation5], 4096
    $region41: #{_lambda_.1} parent=1 // pred_fallthru
      _
    // Predicated region
    $region42: #{_lambda_.1} parent=1 // pred_check
      _
    $region43: #{_lambda_.1} parent=1 // pred_check_branch
      %100 = sbr.rel (0) target = $region45
    $region44: #{_lambda_.1} parent=1 // pred_region
      %101 = dma.done [#allocation5], 2048
    $region45: #{_lambda_.1} parent=1 // pred_fallthru
      _
    // Predicated region
    $region46: #{_lambda_.1} parent=1 // pred_check
      _
    $region47: #{_lambda_.1} parent=1 // pred_check_branch
      %103 = sbr.rel (0) target = $region49
    $region48: #{_lambda_.1} parent=1 // pred_region
      %104 = dma.done [#allocation8], 1024
    $region49: #{_lambda_.1} parent=1 // pred_fallthru
      _
    // Predicated region
    $region50: #{_lambda_.1} parent=1 // pred_check
      _
    $region51: #{_lambda_.1} parent=1 // pred_check_branch
      %106 = sbr.rel (0) target = $region53
    $region52: #{_lambda_.1} parent=1 // pred_region
      %107 = dma.done [#allocation8], 4096
    $region53: #{_lambda_.1} parent=1 // pred_fallthru
      _
    // Predicated region
    $region54: #{_lambda_.1} parent=1 // pred_check
      _
    $region55: #{_lambda_.1} parent=1 // pred_check_branch
      %109 = sbr.rel (0) target = $region57
    $region56: #{_lambda_.1} parent=1 // pred_region
      %110 = dma.done [#allocation11], 8192
    $region57: #{_lambda_.1} parent=1 // pred_fallthru
      _
    %v111 = vld [vmem:[%s0] sm:$0xf]
    %v112 = vld [vmem:[#allocation2] sm:$0xff]
    %v113 = vld [vmem:[#allocation2 + $0x8] sm:$0xff]
    %v114 = vld [vmem:[#allocation2 + $0x10] sm:$0xff]
    %v115 = vld [vmem:[#allocation2 + $0x18] sm:$0xff]
    %v116 = vld [vmem:[#allocation2 + $0x20] sm:$0xff]
    %v117 = vld [vmem:[#allocation2 + $0x28] sm:$0xff]
    %v118 = vld [vmem:[#allocation2 + $0x30] sm:$0xff]
    %v119 = vld [vmem:[#allocation2 + $0x38] sm:$0xff]
    %v120 = vld [vmem:[#allocation2 + $0x40] sm:$0xff]
    %v121 = vld [vmem:[#allocation2 + $0x48] sm:$0xff]
    %v122 = vld [vmem:[#allocation2 + $0x50] sm:$0xff]
    %v123 = vld [vmem:[#allocation2 + $0x58] sm:$0xff]
    %v124 = vld [vmem:[#allocation2 + $0x60] sm:$0xff]
    %v125 = vld [vmem:[#allocation2 + $0x68] sm:$0xff]
    %v126 = vld [vmem:[#allocation2 + $0x70] sm:$0xff]
    %v127 = vld [vmem:[#allocation2 + $0x78] sm:$0xff]
    %v128 = vld [vmem:[#allocation2 + $0x80] sm:$0xff]
    %v129 = vld [vmem:[#allocation2 + $0x88] sm:$0xff]
    %v130 = vld [vmem:[#allocation2 + $0x90] sm:$0xff]
    %v131 = vld [vmem:[#allocation2 + $0x98] sm:$0xff]
    %v132 = vld [vmem:[#allocation2 + $0xa0] sm:$0xff]
    %v133 = vld [vmem:[#allocation2 + $0xa8] sm:$0xff]
    %v134 = vld [vmem:[#allocation2 + $0xb0] sm:$0xff]
    %v135 = vld [vmem:[#allocation2 + $0xb8] sm:$0xff]
    %v136 = vld [vmem:[#allocation2 + $0xc0] sm:$0xff]
    %v137 = vld [vmem:[#allocation2 + $0xc8] sm:$0xff]
    %v138 = vld [vmem:[#allocation2 + $0xd0] sm:$0xff]
    %v139 = vld [vmem:[#allocation2 + $0xd8] sm:$0xff]
    %v140 = vld [vmem:[#allocation2 + $0xe0] sm:$0xff]
    %v141 = vld [vmem:[#allocation2 + $0xe8] sm:$0xff]
    %v142 = vld [vmem:[#allocation2 + $0xf0] sm:$0xff]
    %v143 = vld [vmem:[#allocation2 + $0xf8] sm:$0xff]
    %v144 = vld [vmem:[#allocation2 + $0x100] sm:$0xff]
    %v145 = vld [vmem:[#allocation2 + $0x108] sm:$0xff]
    %v146 = vld [vmem:[#allocation2 + $0x110] sm:$0xff]
    %v147 = vld [vmem:[#allocation2 + $0x118] sm:$0xff]
    %v148 = vld [vmem:[#allocation2 + $0x120] sm:$0xff]
    %v149 = vld [vmem:[#allocation2 + $0x128] sm:$0xff]
    %v150 = vld [vmem:[#allocation2 + $0x130] sm:$0xff]
    %v151 = vld [vmem:[#allocation2 + $0x138] sm:$0xff]
    %v152 = vld [vmem:[#allocation2 + $0x140] sm:$0xff]
    %v153 = vld [vmem:[#allocation2 + $0x148] sm:$0xff]
    %v154 = vld [vmem:[#allocation2 + $0x150] sm:$0xff]
    %v155 = vld [vmem:[#allocation2 + $0x158] sm:$0xff]
    %v156 = vld [vmem:[#allocation2 + $0x160] sm:$0xff]
    %v157 = vld [vmem:[#allocation2 + $0x168] sm:$0xff]
    %v158 = vld [vmem:[#allocation2 + $0x170] sm:$0xff]
    %v159 = vld [vmem:[#allocation2 + $0x178] sm:$0xff]
    %v160 = vld [vmem:[#allocation2 + $0x180] sm:$0xff]
    %v161 = vld [vmem:[#allocation2 + $0x188] sm:$0xff]
    %v162 = vld [vmem:[#allocation2 + $0x190] sm:$0xff]
    %v163 = vld [vmem:[#allocation2 + $0x198] sm:$0xff]
    %v164 = vld [vmem:[#allocation2 + $0x1a0] sm:$0xff]
    %v165 = vld [vmem:[#allocation2 + $0x1a8] sm:$0xff]
    %v166 = vld [vmem:[#allocation2 + $0x1b0] sm:$0xff]
    %v167 = vld [vmem:[#allocation2 + $0x1b8] sm:$0xff]
    %v168 = vld [vmem:[#allocation2 + $0x1c0] sm:$0xff]
    %v169 = vld [vmem:[#allocation2 + $0x1c8] sm:$0xff]
    %v170 = vld [vmem:[#allocation2 + $0x1d0] sm:$0xff]
    %v171 = vld [vmem:[#allocation2 + $0x1d8] sm:$0xff]
    %v172 = vld [vmem:[#allocation2 + $0x1e0] sm:$0xff]
    %v173 = vld [vmem:[#allocation2 + $0x1e8] sm:$0xff]
    %v174 = vld [vmem:[#allocation2 + $0x1f0] sm:$0xff]
    %v175 = vld [vmem:[#allocation2 + $0x1f8] sm:$0xff]
    %v176 = vld [vmem:[%s7] ss:$8 sm:$0x3]
    %v178 = vlaneseq
    %v179 = vshrl.u32 %v178, 7
    %v180 = vsub.s32 0, %v179
    %v181 = vrot.slane %v176, %v180
    %v182 = vlaneseq
    %v183 = vshrl.u32 %v182, 7
    %v184 = vsub.s32 1, %v183
    %v185 = vrot.slane %v176, %v184
    %v190 = vunpack.c.l.s4 1983009808
    %v191 = vunpack.c.0.s8 %v190
    %v192 = vlaneseq
    %v193 = vshrl.u32 %v192, 7
    %v194 = vsub.s32 %v191, %v193
    %v195 = vrot.slane %v111, %v194
    %v196 = vcombine.high %v195, %v195
    %199 = vmatprep.subr.mxu0 %v113
    %200 = vmatpush1.msra.mxu0 %v112
    %201 = vmatprep.subr.mxu0 %v115
    %202 = vmatpush1.msra.mxu0 %v114
    %203 = vmatprep.subr.mxu0 %v117
    %204 = vmatpush1.msra.mxu0 %v116
    %205 = vmatprep.subr.mxu0 %v119
    %206 = vmatpush1.msra.mxu0 %v118
    %207 = vmatprep.subr.mxu0 %v121
    %208 = vmatpush1.msra.mxu0 %v120
    %209 = vmatprep.subr.mxu0 %v123
    %210 = vmatpush1.msra.mxu0 %v122
    %211 = vmatprep.subr.mxu0 %v125
    %212 = vmatpush1.msra.mxu0 %v124
    %213 = vmatprep.subr.mxu0 %v127
    %214 = vmatpush1.msra.mxu0 %v126
    %215 = vmatprep.subr.mxu0 %v129
    %216 = vmatpush1.msra.mxu0 %v128
    %217 = vmatprep.subr.mxu0 %v131
    %218 = vmatpush1.msra.mxu0 %v130
    %219 = vmatprep.subr.mxu0 %v133
    %220 = vmatpush1.msra.mxu0 %v132
    %221 = vmatprep.subr.mxu0 %v135
    %222 = vmatpush1.msra.mxu0 %v134
    %223 = vmatprep.subr.mxu0 %v137
    %224 = vmatpush1.msra.mxu0 %v136
    %225 = vmatprep.subr.mxu0 %v139
    %226 = vmatpush1.msra.mxu0 %v138
    %227 = vmatprep.subr.mxu0 %v141
    %228 = vmatpush1.msra.mxu0 %v140
    %229 = vmatprep.subr.mxu0 %v143
    %230 = vmatpush1.msra.mxu0 %v142
    %231 = vmatprep.subr.mxu0 %v145
    %232 = vmatpush1.msra.mxu0 %v144
    %233 = vmatprep.subr.mxu0 %v147
    %234 = vmatpush1.msra.mxu0 %v146
    %235 = vmatprep.subr.mxu0 %v149
    %236 = vmatpush1.msra.mxu0 %v148
    %237 = vmatprep.subr.mxu0 %v151
    %238 = vmatpush1.msra.mxu0 %v150
    %239 = vmatprep.subr.mxu0 %v153
    %240 = vmatpush1.msra.mxu0 %v152
    %241 = vmatprep.subr.mxu0 %v155
    %242 = vmatpush1.msra.mxu0 %v154
    %243 = vmatprep.subr.mxu0 %v157
    %244 = vmatpush1.msra.mxu0 %v156
    %245 = vmatprep.subr.mxu0 %v159
    %246 = vmatpush1.msra.mxu0 %v158
    %247 = vmatprep.subr.mxu0 %v161
    %248 = vmatpush1.msra.mxu0 %v160
    %249 = vmatprep.subr.mxu0 %v163
    %250 = vmatpush1.msra.mxu0 %v162
    %251 = vmatprep.subr.mxu0 %v165
    %252 = vmatpush1.msra.mxu0 %v164
    %253 = vmatprep.subr.mxu0 %v167
    %254 = vmatpush1.msra.mxu0 %v166
    %255 = vmatprep.subr.mxu0 %v169
    %256 = vmatpush1.msra.mxu0 %v168
    %257 = vmatprep.subr.mxu0 %v171
    %258 = vmatpush1.msra.mxu0 %v170
    %259 = vmatprep.subr.mxu0 %v173
    %260 = vmatpush1.msra.mxu0 %v172
    %261 = vmatprep.subr.mxu0 %v175
    %262 = vmatpush1.msra.mxu0 %v174
    %263 = vmatprep.mubr.f32.mxu0 %v196
    %264 = vmatmul.mubr.f32.gmra.mrb[0].mxu0 %v195
    %v265 = vpop.f32.mrb[0].mxu0
    %v266 = vadd.f32 %v181, %v265
    %v267 = vpop.f32.mrb[0].mxu0
    %v268 = vadd.f32 %v185, %v267
    %269 = vdwg.mxu0
    %v270 = vmax.f32 %v266, 0.0
    %v271 = vmax.f32 %v268, 0.0
    %v272 = vld [vmem:[#allocation4] sm:$0xff]
    %v273 = vld [vmem:[#allocation4 + $0x8] sm:$0xff]
    %v274 = vld [vmem:[#allocation4 + $0x10] sm:$0xff]
    %v275 = vld [vmem:[#allocation4 + $0x18] sm:$0xff]
    %v276 = vld [vmem:[#allocation4 + $0x20] sm:$0xff]
    %v277 = vld [vmem:[#allocation4 + $0x28] sm:$0xff]
    %v278 = vld [vmem:[#allocation4 + $0x30] sm:$0xff]
    %v279 = vld [vmem:[#allocation4 + $0x38] sm:$0xff]
    %v280 = vld [vmem:[#allocation4 + $0x40] sm:$0xff]
    %v281 = vld [vmem:[#allocation4 + $0x48] sm:$0xff]
    %v282 = vld [vmem:[#allocation4 + $0x50] sm:$0xff]
    %v283 = vld [vmem:[#allocation4 + $0x58] sm:$0xff]
    %v284 = vld [vmem:[#allocation4 + $0x60] sm:$0xff]
    %v285 = vld [vmem:[#allocation4 + $0x68] sm:$0xff]
    %v286 = vld [vmem:[#allocation4 + $0x70] sm:$0xff]
    %v287 = vld [vmem:[#allocation4 + $0x78] sm:$0xff]
    %v288 = vld [vmem:[#allocation4 + $0x80] sm:$0xff]
    %v289 = vld [vmem:[#allocation4 + $0x88] sm:$0xff]
    %v290 = vld [vmem:[#allocation4 + $0x90] sm:$0xff]
    %v291 = vld [vmem:[#allocation4 + $0x98] sm:$0xff]
    %v292 = vld [vmem:[#allocation4 + $0xa0] sm:$0xff]
    %v293 = vld [vmem:[#allocation4 + $0xa8] sm:$0xff]
    %v294 = vld [vmem:[#allocation4 + $0xb0] sm:$0xff]
    %v295 = vld [vmem:[#allocation4 + $0xb8] sm:$0xff]
    %v296 = vld [vmem:[#allocation4 + $0xc0] sm:$0xff]
    %v297 = vld [vmem:[#allocation4 + $0xc8] sm:$0xff]
    %v298 = vld [vmem:[#allocation4 + $0xd0] sm:$0xff]
    %v299 = vld [vmem:[#allocation4 + $0xd8] sm:$0xff]
    %v300 = vld [vmem:[#allocation4 + $0xe0] sm:$0xff]
    %v301 = vld [vmem:[#allocation4 + $0xe8] sm:$0xff]
    %v302 = vld [vmem:[#allocation4 + $0xf0] sm:$0xff]
    %v303 = vld [vmem:[#allocation4 + $0xf8] sm:$0xff]
    %v304 = vld [vmem:[%s7 + $0x1] ss:$0 sm:$0xff]
    %305 = vmatprep.subr.mxu0 0.0
    %306 = vmatpush1.msra.mxu0 %v272
    %307 = vmatprep.subr.mxu0 0.0
    %308 = vmatpush1.msra.mxu0 %v273
    %309 = vmatprep.subr.mxu0 0.0
    %310 = vmatpush1.msra.mxu0 %v274
    %311 = vmatprep.subr.mxu0 0.0
    %312 = vmatpush1.msra.mxu0 %v275
    %313 = vmatprep.subr.mxu0 0.0
    %314 = vmatpush1.msra.mxu0 %v276
    %315 = vmatprep.subr.mxu0 0.0
    %316 = vmatpush1.msra.mxu0 %v277
    %317 = vmatprep.subr.mxu0 0.0
    %318 = vmatpush1.msra.mxu0 %v278
    %319 = vmatprep.subr.mxu0 0.0
    %320 = vmatpush1.msra.mxu0 %v279
    %321 = vmatprep.subr.mxu0 0.0
    %322 = vmatpush1.msra.mxu0 %v280
    %323 = vmatprep.subr.mxu0 0.0
    %324 = vmatpush1.msra.mxu0 %v281
    %325 = vmatprep.subr.mxu0 0.0
    %326 = vmatpush1.msra.mxu0 %v282
    %327 = vmatprep.subr.mxu0 0.0
    %328 = vmatpush1.msra.mxu0 %v283
    %329 = vmatprep.subr.mxu0 0.0
    %330 = vmatpush1.msra.mxu0 %v284
    %331 = vmatprep.subr.mxu0 0.0
    %332 = vmatpush1.msra.mxu0 %v285
    %333 = vmatprep.subr.mxu0 0.0
    %334 = vmatpush1.msra.mxu0 %v286
    %335 = vmatprep.subr.mxu0 0.0
    %336 = vmatpush1.msra.mxu0 %v287
    %337 = vmatprep.subr.mxu0 0.0
    %338 = vmatpush1.msra.mxu0 %v288
    %339 = vmatprep.subr.mxu0 0.0
    %340 = vmatpush1.msra.mxu0 %v289
    %341 = vmatprep.subr.mxu0 0.0
    %342 = vmatpush1.msra.mxu0 %v290
    %343 = vmatprep.subr.mxu0 0.0
    %344 = vmatpush1.msra.mxu0 %v291
    %345 = vmatprep.subr.mxu0 0.0
    %346 = vmatpush1.msra.mxu0 %v292
    %347 = vmatprep.subr.mxu0 0.0
    %348 = vmatpush1.msra.mxu0 %v293
    %349 = vmatprep.subr.mxu0 0.0
    %350 = vmatpush1.msra.mxu0 %v294
    %351 = vmatprep.subr.mxu0 0.0
    %352 = vmatpush1.msra.mxu0 %v295
    %353 = vmatprep.subr.mxu0 0.0
    %354 = vmatpush1.msra.mxu0 %v296
    %355 = vmatprep.subr.mxu0 0.0
    %356 = vmatpush1.msra.mxu0 %v297
    %357 = vmatprep.subr.mxu0 0.0
    %358 = vmatpush1.msra.mxu0 %v298
    %359 = vmatprep.subr.mxu0 0.0
    %360 = vmatpush1.msra.mxu0 %v299
    %361 = vmatprep.subr.mxu0 0.0
    %362 = vmatpush1.msra.mxu0 %v300
    %363 = vmatprep.subr.mxu0 0.0
    %364 = vmatpush1.msra.mxu0 %v301
    %365 = vmatprep.subr.mxu0 0.0
    %366 = vmatpush1.msra.mxu0 %v302
    %367 = vmatprep.subr.mxu0 0.0
    %368 = vmatpush1.msra.mxu0 %v303
    %369 = vmatprep.mubr.f32.mxu0 %v271
    %370 = vmatmul.mubr.f32.gmra.mrb[0].mxu0 %v270
    %v371 = vpop.f32.mrb[0].mxu0
    %v372 = vadd.f32 %v304, %v371
    %v373 = vpop.f32.mrb[0].mxu0
    %374 = vdwg.mxu0
    %v375 = vmax.f32 %v372, 0.0
    %v376 = vld [vmem:[#allocation6] sm:$0xff]
    %v377 = vld [vmem:[#allocation6 + $0x8] sm:$0xff]
    %v378 = vld [vmem:[#allocation6 + $0x10] sm:$0xff]
    %v379 = vld [vmem:[#allocation6 + $0x18] sm:$0xff]
    %v380 = vld [vmem:[#allocation6 + $0x20] sm:$0xff]
    %v381 = vld [vmem:[#allocation6 + $0x28] sm:$0xff]
    %v382 = vld [vmem:[#allocation6 + $0x30] sm:$0xff]
    %v383 = vld [vmem:[#allocation6 + $0x38] sm:$0xff]
    %v384 = vld [vmem:[#allocation6 + $0x40] sm:$0xff]
    %v385 = vld [vmem:[#allocation6 + $0x48] sm:$0xff]
    %v386 = vld [vmem:[#allocation6 + $0x50] sm:$0xff]
    %v387 = vld [vmem:[#allocation6 + $0x58] sm:$0xff]
    %v388 = vld [vmem:[#allocation6 + $0x60] sm:$0xff]
    %v389 = vld [vmem:[#allocation6 + $0x68] sm:$0xff]
    %v390 = vld [vmem:[#allocation6 + $0x70] sm:$0xff]
    %v391 = vld [vmem:[#allocation6 + $0x78] sm:$0xff]
    %v392 = vld [vmem:[%s7 + $0x2] ss:$0 sm:$0xff]
    %393 = vmatprep.subr.mxu0 0.0
    %394 = vmatpush1.msra.mxu0 %v376
    %395 = vmatprep.subr.mxu0 0.0
    %396 = vmatpush1.msra.mxu0 %v377
    %397 = vmatprep.subr.mxu0 0.0
    %398 = vmatpush1.msra.mxu0 %v378
    %399 = vmatprep.subr.mxu0 0.0
    %400 = vmatpush1.msra.mxu0 %v379
    %401 = vmatprep.subr.mxu0 0.0
    %402 = vmatpush1.msra.mxu0 %v380
    %403 = vmatprep.subr.mxu0 0.0
    %404 = vmatpush1.msra.mxu0 %v381
    %405 = vmatprep.subr.mxu0 0.0
    %406 = vmatpush1.msra.mxu0 %v382
    %407 = vmatprep.subr.mxu0 0.0
    %408 = vmatpush1.msra.mxu0 %v383
    %409 = vmatprep.subr.mxu0 0.0
    %410 = vmatpush1.msra.mxu0 %v384
    %411 = vmatprep.subr.mxu0 0.0
    %412 = vmatpush1.msra.mxu0 %v385
    %413 = vmatprep.subr.mxu0 0.0
    %414 = vmatpush1.msra.mxu0 %v386
    %415 = vmatprep.subr.mxu0 0.0
    %416 = vmatpush1.msra.mxu0 %v387
    %417 = vmatprep.subr.mxu0 0.0
    %418 = vmatpush1.msra.mxu0 %v388
    %419 = vmatprep.subr.mxu0 0.0
    %420 = vmatpush1.msra.mxu0 %v389
    %421 = vmatprep.subr.mxu0 0.0
    %422 = vmatpush1.msra.mxu0 %v390
    %423 = vmatprep.subr.mxu0 0.0
    %424 = vmatpush1.msra.mxu0 %v391
    %425 = vmatprep.subr.mxu0 0.0
    %426 = vmatpush1.msra.mxu0 0.0
    %427 = vmatprep.subr.mxu0 0.0
    %428 = vmatpush1.msra.mxu0 0.0
    %429 = vmatprep.subr.mxu0 0.0
    %430 = vmatpush1.msra.mxu0 0.0
    %431 = vmatprep.subr.mxu0 0.0
    %432 = vmatpush1.msra.mxu0 0.0
    %433 = vmatprep.subr.mxu0 0.0
    %434 = vmatpush1.msra.mxu0 0.0
    %435 = vmatprep.subr.mxu0 0.0
    %436 = vmatpush1.msra.mxu0 0.0
    %437 = vmatprep.subr.mxu0 0.0
    %438 = vmatpush1.msra.mxu0 0.0
    %439 = vmatprep.subr.mxu0 0.0
    %440 = vmatpush1.msra.mxu0 0.0
    %441 = vmatprep.subr.mxu0 0.0
    %442 = vmatpush1.msra.mxu0 0.0
    %443 = vmatprep.subr.mxu0 0.0
    %444 = vmatpush1.msra.mxu0 0.0
    %445 = vmatprep.subr.mxu0 0.0
    %446 = vmatpush1.msra.mxu0 0.0
    %447 = vmatprep.subr.mxu0 0.0
    %448 = vmatpush1.msra.mxu0 0.0
    %449 = vmatprep.subr.mxu0 0.0
    %450 = vmatpush1.msra.mxu0 0.0
    %451 = vmatprep.subr.mxu0 0.0
    %452 = vmatpush1.msra.mxu0 0.0
    %453 = vmatprep.subr.mxu0 0.0
    %454 = vmatpush1.msra.mxu0 0.0
    %455 = vmatprep.subr.mxu0 0.0
    %456 = vmatpush1.msra.mxu0 0.0
    %457 = vmatprep.mubr.f32.mxu0 0.0
    %458 = vmatmul.mubr.f32.gmra.mrb[0].mxu0 %v375
    %v459 = vpop.f32.mrb[0].mxu0
    %v460 = vadd.f32 %v392, %v459
    %v461 = vpop.f32.mrb[0].mxu0
    %462 = vdwg.mxu0
    %v463 = vmax.f32 %v460, 0.0
    %v464 = vld [vmem:[#allocation7] sm:$0xff]
    %v465 = vld [vmem:[#allocation7 + $0x8] sm:$0xff]
    %v466 = vld [vmem:[#allocation7 + $0x10] sm:$0xff]
    %v467 = vld [vmem:[#allocation7 + $0x18] sm:$0xff]
    %v468 = vld [vmem:[#allocation7 + $0x20] sm:$0xff]
    %v469 = vld [vmem:[#allocation7 + $0x28] sm:$0xff]
    %v470 = vld [vmem:[#allocation7 + $0x30] sm:$0xff]
    %v471 = vld [vmem:[#allocation7 + $0x38] sm:$0xff]
    %v472 = vld [vmem:[%s7 + $0x3] ss:$0 sm:$0xff]
    %vm473 = vcmask 523264
    %v475 = vsel %vm473, %v463, 0
    %477 = vmatprep.subr.mxu0 0.0
    %478 = vmatpush1.msra.mxu0 %v464
    %479 = vmatprep.subr.mxu0 0.0
    %480 = vmatpush1.msra.mxu0 %v465
    %481 = vmatprep.subr.mxu0 0.0
    %482 = vmatpush1.msra.mxu0 %v466
    %483 = vmatprep.subr.mxu0 0.0
    %484 = vmatpush1.msra.mxu0 %v467
    %485 = vmatprep.subr.mxu0 0.0
    %486 = vmatpush1.msra.mxu0 %v468
    %487 = vmatprep.subr.mxu0 0.0
    %488 = vmatpush1.msra.mxu0 %v469
    %489 = vmatprep.subr.mxu0 0.0
    %490 = vmatpush1.msra.mxu0 %v470
    %491 = vmatprep.subr.mxu0 0.0
    %492 = vmatpush1.msra.mxu0 %v471
    %493 = vmatprep.subr.mxu0 0.0
    %494 = vmatpush1.msra.mxu0 0.0
    %495 = vmatprep.subr.mxu0 0.0
    %496 = vmatpush1.msra.mxu0 0.0
    %497 = vmatprep.subr.mxu0 0.0
    %498 = vmatpush1.msra.mxu0 0.0
    %499 = vmatprep.subr.mxu0 0.0
    %500 = vmatpush1.msra.mxu0 0.0
    %501 = vmatprep.subr.mxu0 0.0
    %502 = vmatpush1.msra.mxu0 0.0
    %503 = vmatprep.subr.mxu0 0.0
    %504 = vmatpush1.msra.mxu0 0.0
    %505 = vmatprep.subr.mxu0 0.0
    %506 = vmatpush1.msra.mxu0 0.0
    %507 = vmatprep.subr.mxu0 0.0
    %508 = vmatpush1.msra.mxu0 0.0
    %509 = vmatprep.subr.mxu0 0.0
    %510 = vmatpush1.msra.mxu0 0.0
    %511 = vmatprep.subr.mxu0 0.0
    %512 = vmatpush1.msra.mxu0 0.0
    %513 = vmatprep.subr.mxu0 0.0
    %514 = vmatpush1.msra.mxu0 0.0
    %515 = vmatprep.subr.mxu0 0.0
    %516 = vmatpush1.msra.mxu0 0.0
    %517 = vmatprep.subr.mxu0 0.0
    %518 = vmatpush1.msra.mxu0 0.0
    %519 = vmatprep.subr.mxu0 0.0
    %520 = vmatpush1.msra.mxu0 0.0
    %521 = vmatprep.subr.mxu0 0.0
    %522 = vmatpush1.msra.mxu0 0.0
    %523 = vmatprep.subr.mxu0 0.0
    %524 = vmatpush1.msra.mxu0 0.0
    %525 = vmatprep.subr.mxu0 0.0
    %526 = vmatpush1.msra.mxu0 0.0
    %527 = vmatprep.subr.mxu0 0.0
    %528 = vmatpush1.msra.mxu0 0.0
    %529 = vmatprep.subr.mxu0 0.0
    %530 = vmatpush1.msra.mxu0 0.0
    %531 = vmatprep.subr.mxu0 0.0
    %532 = vmatpush1.msra.mxu0 0.0
    %533 = vmatprep.subr.mxu0 0.0
    %534 = vmatpush1.msra.mxu0 0.0
    %535 = vmatprep.subr.mxu0 0.0
    %536 = vmatpush1.msra.mxu0 0.0
    %537 = vmatprep.subr.mxu0 0.0
    %538 = vmatpush1.msra.mxu0 0.0
    %539 = vmatprep.subr.mxu0 0.0
    %540 = vmatpush1.msra.mxu0 0.0
    %541 = vmatprep.mubr.f32.mxu0 0.0
    %542 = vmatmul.mubr.f32.gmra.mrb[0].mxu0 %v475
    %v543 = vpop.f32.mrb[0].mxu0
    %v544 = vadd.f32 %v472, %v543
    %v545 = vpop.f32.mrb[0].mxu0
    %546 = vdwg.mxu0
    %v547 = vmax.f32 %v544, 0.0
    %v548 = vld [vmem:[#allocation9] sm:$0xff]
    %v549 = vld [vmem:[#allocation9 + $0x8] sm:$0xff]
    %v550 = vld [vmem:[#allocation9 + $0x10] sm:$0xff]
    %v551 = vld [vmem:[#allocation9 + $0x18] sm:$0xff]
    %v552 = vld [vmem:[#allocation9 + $0x20] sm:$0xff]
    %v553 = vld [vmem:[#allocation9 + $0x28] sm:$0xff]
    %v554 = vld [vmem:[#allocation9 + $0x30] sm:$0xff]
    %v555 = vld [vmem:[#allocation9 + $0x38] sm:$0xff]
    %v556 = vld [vmem:[#allocation9 + $0x40] sm:$0xff]
    %v557 = vld [vmem:[#allocation9 + $0x48] sm:$0xff]
    %v558 = vld [vmem:[#allocation9 + $0x50] sm:$0xff]
    %v559 = vld [vmem:[#allocation9 + $0x58] sm:$0xff]
    %v560 = vld [vmem:[#allocation9 + $0x60] sm:$0xff]
    %v561 = vld [vmem:[#allocation9 + $0x68] sm:$0xff]
    %v562 = vld [vmem:[#allocation9 + $0x70] sm:$0xff]
    %v563 = vld [vmem:[#allocation9 + $0x78] sm:$0xff]
    %v564 = vld [vmem:[#allocation9 + $0x80] sm:$0xff]
    %v565 = vld [vmem:[#allocation9 + $0x88] sm:$0xff]
    %v566 = vld [vmem:[#allocation9 + $0x90] sm:$0xff]
    %v567 = vld [vmem:[#allocation9 + $0x98] sm:$0xff]
    %v568 = vld [vmem:[#allocation9 + $0xa0] sm:$0xff]
    %v569 = vld [vmem:[#allocation9 + $0xa8] sm:$0xff]
    %v570 = vld [vmem:[#allocation9 + $0xb0] sm:$0xff]
    %v571 = vld [vmem:[#allocation9 + $0xb8] sm:$0xff]
    %v572 = vld [vmem:[#allocation9 + $0xc0] sm:$0xff]
    %v573 = vld [vmem:[#allocation9 + $0xc8] sm:$0xff]
    %v574 = vld [vmem:[#allocation9 + $0xd0] sm:$0xff]
    %v575 = vld [vmem:[#allocation9 + $0xd8] sm:$0xff]
    %v576 = vld [vmem:[#allocation9 + $0xe0] sm:$0xff]
    %v577 = vld [vmem:[#allocation9 + $0xe8] sm:$0xff]
    %v578 = vld [vmem:[#allocation9 + $0xf0] sm:$0xff]
    %v579 = vld [vmem:[#allocation9 + $0xf8] sm:$0xff]
    %s580 = scalar_lea.vmem %s7, 4
    %v581 = vld [vmem:[%s580] ss:$8 sm:$0x3]
    %v583 = vlaneseq
    %v584 = vshrl.u32 %v583, 7
    %v585 = vsub.s32 0, %v584
    %v586 = vrot.slane %v581, %v585
    %v587 = vlaneseq
    %v588 = vshrl.u32 %v587, 7
    %v589 = vsub.s32 1, %v588
    %v590 = vrot.slane %v581, %v589
    %593 = vmatprep.subr.mxu0 %v549
    %594 = vmatpush1.msra.mxu0 %v548
    %595 = vmatprep.subr.mxu0 %v551
    %596 = vmatpush1.msra.mxu0 %v550
    %597 = vmatprep.subr.mxu0 %v553
    %598 = vmatpush1.msra.mxu0 %v552
    %599 = vmatprep.subr.mxu0 %v555
    %600 = vmatpush1.msra.mxu0 %v554
    %601 = vmatprep.subr.mxu0 %v557
    %602 = vmatpush1.msra.mxu0 %v556
    %603 = vmatprep.subr.mxu0 %v559
    %604 = vmatpush1.msra.mxu0 %v558
    %605 = vmatprep.subr.mxu0 %v561
    %606 = vmatpush1.msra.mxu0 %v560
    %607 = vmatprep.subr.mxu0 %v563
    %608 = vmatpush1.msra.mxu0 %v562
    %609 = vmatprep.subr.mxu0 %v565
    %610 = vmatpush1.msra.mxu0 %v564
    %611 = vmatprep.subr.mxu0 %v567
    %612 = vmatpush1.msra.mxu0 %v566
    %613 = vmatprep.subr.mxu0 %v569
    %614 = vmatpush1.msra.mxu0 %v568
    %615 = vmatprep.subr.mxu0 %v571
    %616 = vmatpush1.msra.mxu0 %v570
    %617 = vmatprep.subr.mxu0 %v573
    %618 = vmatpush1.msra.mxu0 %v572
    %619 = vmatprep.subr.mxu0 %v575
    %620 = vmatpush1.msra.mxu0 %v574
    %621 = vmatprep.subr.mxu0 %v577
    %622 = vmatpush1.msra.mxu0 %v576
    %623 = vmatprep.subr.mxu0 %v579
    %624 = vmatpush1.msra.mxu0 %v578
    %625 = vmatprep.subr.mxu0 0.0
    %626 = vmatpush1.msra.mxu0 0.0
    %627 = vmatprep.subr.mxu0 0.0
    %628 = vmatpush1.msra.mxu0 0.0
    %629 = vmatprep.subr.mxu0 0.0
    %630 = vmatpush1.msra.mxu0 0.0
    %631 = vmatprep.subr.mxu0 0.0
    %632 = vmatpush1.msra.mxu0 0.0
    %633 = vmatprep.subr.mxu0 0.0
    %634 = vmatpush1.msra.mxu0 0.0
    %635 = vmatprep.subr.mxu0 0.0
    %636 = vmatpush1.msra.mxu0 0.0
    %637 = vmatprep.subr.mxu0 0.0
    %638 = vmatpush1.msra.mxu0 0.0
    %639 = vmatprep.subr.mxu0 0.0
    %640 = vmatpush1.msra.mxu0 0.0
    %641 = vmatprep.subr.mxu0 0.0
    %642 = vmatpush1.msra.mxu0 0.0
    %643 = vmatprep.subr.mxu0 0.0
    %644 = vmatpush1.msra.mxu0 0.0
    %645 = vmatprep.subr.mxu0 0.0
    %646 = vmatpush1.msra.mxu0 0.0
    %647 = vmatprep.subr.mxu0 0.0
    %648 = vmatpush1.msra.mxu0 0.0
    %649 = vmatprep.subr.mxu0 0.0
    %650 = vmatpush1.msra.mxu0 0.0
    %651 = vmatprep.subr.mxu0 0.0
    %652 = vmatpush1.msra.mxu0 0.0
    %653 = vmatprep.subr.mxu0 0.0
    %654 = vmatpush1.msra.mxu0 0.0
    %655 = vmatprep.subr.mxu0 0.0
    %656 = vmatpush1.msra.mxu0 0.0
    %657 = vmatprep.mubr.f32.mxu0 0.0
    %658 = vmatmul.mubr.f32.gmra.mrb[0].mxu0 %v547
    %v659 = vpop.f32.mrb[0].mxu0
    %v660 = vadd.f32 %v586, %v659
    %v661 = vpop.f32.mrb[0].mxu0
    %v662 = vadd.f32 %v590, %v661
    %663 = vdwg.mxu0
    %v664 = vmax.f32 %v660, 0.0
    %v665 = vmax.f32 %v662, 0.0
    %v666 = vld [vmem:[#allocation10] sm:$0xff]
    %v667 = vld [vmem:[#allocation10 + $0x8] sm:$0xff]
    %v668 = vld [vmem:[#allocation10 + $0x10] sm:$0xff]
    %v669 = vld [vmem:[#allocation10 + $0x18] sm:$0xff]
    %v670 = vld [vmem:[#allocation10 + $0x20] sm:$0xff]
    %v671 = vld [vmem:[#allocation10 + $0x28] sm:$0xff]
    %v672 = vld [vmem:[#allocation10 + $0x30] sm:$0xff]
    %v673 = vld [vmem:[#allocation10 + $0x38] sm:$0xff]
    %v674 = vld [vmem:[#allocation10 + $0x40] sm:$0xff]
    %v675 = vld [vmem:[#allocation10 + $0x48] sm:$0xff]
    %v676 = vld [vmem:[#allocation10 + $0x50] sm:$0xff]
    %v677 = vld [vmem:[#allocation10 + $0x58] sm:$0xff]
    %v678 = vld [vmem:[#allocation10 + $0x60] sm:$0xff]
    %v679 = vld [vmem:[#allocation10 + $0x68] sm:$0xff]
    %v680 = vld [vmem:[#allocation10 + $0x70] sm:$0xff]
    %v681 = vld [vmem:[#allocation10 + $0x78] sm:$0xff]
    %v682 = vld [vmem:[#allocation10 + $0x80] sm:$0xff]
    %v683 = vld [vmem:[#allocation10 + $0x88] sm:$0xff]
    %v684 = vld [vmem:[#allocation10 + $0x90] sm:$0xff]
    %v685 = vld [vmem:[#allocation10 + $0x98] sm:$0xff]
    %v686 = vld [vmem:[#allocation10 + $0xa0] sm:$0xff]
    %v687 = vld [vmem:[#allocation10 + $0xa8] sm:$0xff]
    %v688 = vld [vmem:[#allocation10 + $0xb0] sm:$0xff]
    %v689 = vld [vmem:[#allocation10 + $0xb8] sm:$0xff]
    %v690 = vld [vmem:[#allocation10 + $0xc0] sm:$0xff]
    %v691 = vld [vmem:[#allocation10 + $0xc8] sm:$0xff]
    %v692 = vld [vmem:[#allocation10 + $0xd0] sm:$0xff]
    %v693 = vld [vmem:[#allocation10 + $0xd8] sm:$0xff]
    %v694 = vld [vmem:[#allocation10 + $0xe0] sm:$0xff]
    %v695 = vld [vmem:[#allocation10 + $0xe8] sm:$0xff]
    %v696 = vld [vmem:[#allocation10 + $0xf0] sm:$0xff]
    %v697 = vld [vmem:[#allocation10 + $0xf8] sm:$0xff]
    %v698 = vld [vmem:[#allocation10 + $0x100] sm:$0xff]
    %v699 = vld [vmem:[#allocation10 + $0x108] sm:$0xff]
    %v700 = vld [vmem:[#allocation10 + $0x110] sm:$0xff]
    %v701 = vld [vmem:[#allocation10 + $0x118] sm:$0xff]
    %v702 = vld [vmem:[#allocation10 + $0x120] sm:$0xff]
    %v703 = vld [vmem:[#allocation10 + $0x128] sm:$0xff]
    %v704 = vld [vmem:[#allocation10 + $0x130] sm:$0xff]
    %v705 = vld [vmem:[#allocation10 + $0x138] sm:$0xff]
    %v706 = vld [vmem:[#allocation10 + $0x140] sm:$0xff]
    %v707 = vld [vmem:[#allocation10 + $0x148] sm:$0xff]
    %v708 = vld [vmem:[#allocation10 + $0x150] sm:$0xff]
    %v709 = vld [vmem:[#allocation10 + $0x158] sm:$0xff]
    %v710 = vld [vmem:[#allocation10 + $0x160] sm:$0xff]
    %v711 = vld [vmem:[#allocation10 + $0x168] sm:$0xff]
    %v712 = vld [vmem:[#allocation10 + $0x170] sm:$0xff]
    %v713 = vld [vmem:[#allocation10 + $0x178] sm:$0xff]
    %v714 = vld [vmem:[#allocation10 + $0x180] sm:$0xff]
    %v715 = vld [vmem:[#allocation10 + $0x188] sm:$0xff]
    %v716 = vld [vmem:[#allocation10 + $0x190] sm:$0xff]
    %v717 = vld [vmem:[#allocation10 + $0x198] sm:$0xff]
    %v718 = vld [vmem:[#allocation10 + $0x1a0] sm:$0xff]
    %v719 = vld [vmem:[#allocation10 + $0x1a8] sm:$0xff]
    %v720 = vld [vmem:[#allocation10 + $0x1b0] sm:$0xff]
    %v721 = vld [vmem:[#allocation10 + $0x1b8] sm:$0xff]
    %v722 = vld [vmem:[#allocation10 + $0x1c0] sm:$0xff]
    %v723 = vld [vmem:[#allocation10 + $0x1c8] sm:$0xff]
    %v724 = vld [vmem:[#allocation10 + $0x1d0] sm:$0xff]
    %v725 = vld [vmem:[#allocation10 + $0x1d8] sm:$0xff]
    %v726 = vld [vmem:[#allocation10 + $0x1e0] sm:$0xff]
    %v727 = vld [vmem:[#allocation10 + $0x1e8] sm:$0xff]
    %v728 = vld [vmem:[#allocation10 + $0x1f0] sm:$0xff]
    %v729 = vld [vmem:[#allocation10 + $0x1f8] sm:$0xff]
    %s730 = scalar_lea.vmem %s7, 5
    %v731 = vld [vmem:[%s730] ss:$8 sm:$0x3]
    %v733 = vlaneseq
    %v734 = vshrl.u32 %v733, 7
    %v735 = vsub.s32 0, %v734
    %v736 = vrot.slane %v731, %v735
    %v737 = vlaneseq
    %v738 = vshrl.u32 %v737, 7
    %v739 = vsub.s32 1, %v738
    %v740 = vrot.slane %v731, %v739
    %743 = vmatprep.subr.mxu0 %v667
    %744 = vmatpush1.msra.mxu0 %v666
    %745 = vmatprep.subr.mxu0 %v669
    %746 = vmatpush1.msra.mxu0 %v668
    %747 = vmatprep.subr.mxu0 %v671
    %748 = vmatpush1.msra.mxu0 %v670
    %749 = vmatprep.subr.mxu0 %v673
    %750 = vmatpush1.msra.mxu0 %v672
    %751 = vmatprep.subr.mxu0 %v675
    %752 = vmatpush1.msra.mxu0 %v674
    %753 = vmatprep.subr.mxu0 %v677
    %754 = vmatpush1.msra.mxu0 %v676
    %755 = vmatprep.subr.mxu0 %v679
    %756 = vmatpush1.msra.mxu0 %v678
    %757 = vmatprep.subr.mxu0 %v681
    %758 = vmatpush1.msra.mxu0 %v680
    %759 = vmatprep.subr.mxu0 %v683
    %760 = vmatpush1.msra.mxu0 %v682
    %761 = vmatprep.subr.mxu0 %v685
    %762 = vmatpush1.msra.mxu0 %v684
    %763 = vmatprep.subr.mxu0 %v687
    %764 = vmatpush1.msra.mxu0 %v686
    %765 = vmatprep.subr.mxu0 %v689
    %766 = vmatpush1.msra.mxu0 %v688
    %767 = vmatprep.subr.mxu0 %v691
    %768 = vmatpush1.msra.mxu0 %v690
    %769 = vmatprep.subr.mxu0 %v693
    %770 = vmatpush1.msra.mxu0 %v692
    %771 = vmatprep.subr.mxu0 %v695
    %772 = vmatpush1.msra.mxu0 %v694
    %773 = vmatprep.subr.mxu0 %v697
    %774 = vmatpush1.msra.mxu0 %v696
    %775 = vmatprep.subr.mxu0 %v699
    %776 = vmatpush1.msra.mxu0 %v698
    %777 = vmatprep.subr.mxu0 %v701
    %778 = vmatpush1.msra.mxu0 %v700
    %779 = vmatprep.subr.mxu0 %v703
    %780 = vmatpush1.msra.mxu0 %v702
    %781 = vmatprep.subr.mxu0 %v705
    %782 = vmatpush1.msra.mxu0 %v704
    %783 = vmatprep.subr.mxu0 %v707
    %784 = vmatpush1.msra.mxu0 %v706
    %785 = vmatprep.subr.mxu0 %v709
    %786 = vmatpush1.msra.mxu0 %v708
    %787 = vmatprep.subr.mxu0 %v711
    %788 = vmatpush1.msra.mxu0 %v710
    %789 = vmatprep.subr.mxu0 %v713
    %790 = vmatpush1.msra.mxu0 %v712
    %791 = vmatprep.subr.mxu0 %v715
    %792 = vmatpush1.msra.mxu0 %v714
    %793 = vmatprep.subr.mxu0 %v717
    %794 = vmatpush1.msra.mxu0 %v716
    %795 = vmatprep.subr.mxu0 %v719
    %796 = vmatpush1.msra.mxu0 %v718
    %797 = vmatprep.subr.mxu0 %v721
    %798 = vmatpush1.msra.mxu0 %v720
    %799 = vmatprep.subr.mxu0 %v723
    %800 = vmatpush1.msra.mxu0 %v722
    %801 = vmatprep.subr.mxu0 %v725
    %802 = vmatpush1.msra.mxu0 %v724
    %803 = vmatprep.subr.mxu0 %v727
    %804 = vmatpush1.msra.mxu0 %v726
    %805 = vmatprep.subr.mxu0 %v729
    %806 = vmatpush1.msra.mxu0 %v728
    %807 = vmatprep.mubr.f32.mxu0 %v665
    %808 = vmatmul.mubr.f32.gmra.mrb[0].mxu0 %v664
    %v809 = vpop.f32.mrb[0].mxu0
    %v810 = vadd.f32 %v736, %v809
    %v811 = vpop.f32.mrb[0].mxu0
    %v812 = vadd.f32 %v740, %v811
    %813 = vdwg.mxu0
    %v814 = vmax.f32 %v810, 0.0
    %v815 = vmax.f32 %v812, 0.0
    %v818 = vcombine.low %v814, %v815
    %v820 = vunpack.c.l.s4 1983009808
    %v821 = vunpack.c.0.s8 %v820
    %v822 = vlaneseq
    %v823 = vshrl.u32 %v822, 7
    %v824 = vsub.s32 %v821, %v823
    %v825 = vrot.slane %v818, %v824
    %827 = vst [vmem:[%s8] sm:$0xf] %v825
    // Predicated region
    $region58: #{_lambda_.1} parent=1 // pred_check
      _
    $region59: #{_lambda_.1} parent=1 // pred_check_branch
      %829 = sbr.rel (0) target = $region61
    $region60: #{_lambda_.1} parent=1 // pred_region
      _
    $region61: #{_lambda_.1} parent=1 // pred_fallthru
      _
    // Predicated region
    $region62: #{_lambda_.1} parent=1 // pred_check
      _
    $region63: #{_lambda_.1} parent=1 // pred_check_branch
      %831 = sbr.rel (0) target = $region65
    $region64: #{_lambda_.1} parent=1 // pred_region
      _
    $region65: #{_lambda_.1} parent=1 // pred_fallthru
      _
    %832 = vsyncpa [#allocation3], 1
    %833 = vsyncpa [#allocation5], 1
    %834 = vsyncpa [#allocation8], 1
    %835 = vsyncpa [#allocation11], 1

</llo_original>
